<compile_context>
chip_gen: v5e
topology: v5e:2x2
jax: 0.10.0
libtpu: 0.0.40
codegen_flags: <defaults>
</compile_context>

<pallas_src>
import collections
import functools

import jax
import jax.numpy as jnp
from jax import lax
from jax.experimental import pallas as pl
from jax.experimental.pallas import tpu as pltpu


# ----------------------------------------------------------------------------
# helpers
# ----------------------------------------------------------------------------
def _pick_tile(n, max_tile=2048):
    """Largest multiple-of-128 divisor of n that is <= max_tile (or n itself
    if n is not a multiple of 128 -> single full block)."""
    if n % 128 != 0:
        return n
    t = min(n, max_tile)
    while n % t != 0:
        t -= 128
    return t


# ----------------------------------------------------------------------------
# Pallas kernel 1: conv-as-matmul with fused bias + leaky-relu
#   (Cout, K) @ (K, HW_tile) -> (Cout, HW_tile)  -- output is lane-dense.
# ----------------------------------------------------------------------------
def _conv_mm_kernel(w_ref, b_ref, p_ref, o_ref, *, apply_relu):
    acc = jnp.dot(w_ref[...], p_ref[0],
                  preferred_element_type=jnp.float32)     # (Cout, tn) f32
    acc = acc + b_ref[...]                                 # (Cout, 1) broadcast
    if apply_relu:
        acc = jnp.where(acc > 0, acc, 0.1 * acc)           # fused leaky-relu
    o_ref[0] = acc


def conv3x3_pallas(x, w, b, apply_relu=False):
    """3x3 SAME conv (NCHW) via channel-major im2col + lane-dense Pallas matmul,
    with the bias add and (optional) leaky-relu fused into the kernel."""
    B, Cin, H, W = x.shape
    Cout = w.shape[0]
    K = Cin * 9
    HW = H * W

    patches = lax.conv_general_dilated_patches(
        x, filter_shape=(3, 3), window_strides=(1, 1), padding='SAME',
        dimension_numbers=('NCHW', 'OIHW', 'NCHW'))        # (B, Cin*9, H, W)
    patches = patches.reshape(B, K, HW).astype(jnp.bfloat16)
    wm = w.reshape(Cout, K).astype(jnp.bfloat16)            # bf16 MXU operands
    bm = b.reshape(Cout, 1).astype(jnp.float32)

    tn = _pick_tile(HW, max_tile=4096)
    grid = (B, HW // tn)
    kernel = functools.partial(_conv_mm_kernel, apply_relu=apply_relu)

    out = pl.pallas_call(
        kernel,
        out_shape=jax.ShapeDtypeStruct((B, Cout, HW), jnp.float32),
        grid=grid,
        in_specs=[pl.BlockSpec((Cout, K), lambda i, j: (0, 0)),
                  pl.BlockSpec((Cout, 1), lambda i, j: (0, 0)),
                  pl.BlockSpec((1, K, tn), lambda i, j: (i, 0, j))],
        out_specs=pl.BlockSpec((1, Cout, tn), lambda i, j: (i, 0, j)),
        compiler_params=pltpu.CompilerParams(
            dimension_semantics=("parallel", "parallel"),
            vmem_limit_bytes=32 * 1024 * 1024),
    )(wm, bm, patches)
    return out.reshape(B, Cout, H, W)


# ----------------------------------------------------------------------------
# Pallas kernel 2: forward/backward flow consistency check (elementwise)
#   lane-dense (B, 2, H*W) layout, gridded over the spatial dim.
# ----------------------------------------------------------------------------
def _consistency_kernel(ffw_ref, fbw_ref, ffww_ref, fbww_ref,
                        mfw_ref, mbw_ref, cfw_ref, cbw_ref):
    ffw = ffw_ref[...]
    fbw = fbw_ref[...]
    ffww = ffww_ref[...]
    fbww = fbww_ref[...]

    def norm2(x):  # sum over the 2 flow channels, keepdim
        return x[:, 0:1] * x[:, 0:1] + x[:, 1:2] * x[:, 1:2]

    diff_fw = jnp.abs(ffw + ffww)
    diff_bw = jnp.abs(fbw + fbww)
    norm_fw = norm2(ffw) + norm2(ffww)
    norm_bw = norm2(fbw) + norm2(fbww)
    thresh_fw = jnp.maximum(3.0, 0.01 * norm_fw + 0.5)
    thresh_bw = jnp.maximum(3.0, 0.01 * norm_bw + 0.5)
    cfw = norm2(diff_fw)
    cbw = norm2(diff_bw)
    mfw_ref[...] = (cfw < thresh_fw).astype(jnp.float32)
    mbw_ref[...] = (cbw < thresh_bw).astype(jnp.float32)
    cfw_ref[...] = cfw
    cbw_ref[...] = cbw


def consistent_pallas(flow_fw, flow_bw, flow_fw_warped, flow_bw_warped):
    B, _, H, W = flow_fw.shape
    HW = H * W
    tile = _pick_tile(HW)
    grid = (HW // tile,)

    def rs(x):
        return x.reshape(B, 2, HW)

    spec2 = pl.BlockSpec((B, 2, tile), lambda i: (0, 0, i))
    spec1 = pl.BlockSpec((B, 1, tile), lambda i: (0, 0, i))
    out_shape = tuple(jax.ShapeDtypeStruct((B, 1, HW), jnp.float32)
                      for _ in range(4))
    outs = pl.pallas_call(
        _consistency_kernel,
        out_shape=out_shape,
        grid=grid,
        in_specs=[spec2, spec2, spec2, spec2],
        out_specs=(spec1, spec1, spec1, spec1),
        compiler_params=pltpu.CompilerParams(
            dimension_semantics=("parallel",),
            vmem_limit_bytes=32 * 1024 * 1024),
    )(rs(flow_fw), rs(flow_bw), rs(flow_fw_warped), rs(flow_bw_warped))
    return tuple(o.reshape(B, 1, H, W) for o in outs)


# ----------------------------------------------------------------------------
# Pallas kernel 3: masked L1 photometric loss (reduction with VMEM accumulators)
#   lane-dense (B, C, H*W), grid over spatial dim marked "arbitrary".
# ----------------------------------------------------------------------------
def _sum_last2(x):  # (B, C, T) -> (B, 1, 1)
    s = jnp.sum(x, axis=2, keepdims=True)
    s = jnp.sum(s, axis=1, keepdims=True)
    return s


def _masked_l1_kernel(img_ref, wrp_ref, msk_ref, o_ref, err_acc, msk_acc,
                      *, inv_chw, inv_hw):
    k = pl.program_id(0)

    @pl.when(k == 0)
    def _():
        err_acc[...] = jnp.zeros_like(err_acc)
        msk_acc[...] = jnp.zeros_like(msk_acc)

    img = img_ref[...]          # (B, C, tile)
    wrp = wrp_ref[...]
    msk = msk_ref[...]          # (B, 1, tile) broadcasts over C
    err = jnp.abs(img - wrp) * msk
    err_acc[...] += _sum_last2(err)
    msk_acc[...] += _sum_last2(msk)

    @pl.when(k == pl.num_programs(0) - 1)
    def _():
        err_mean = err_acc[...] * inv_chw
        msk_mean = msk_acc[...] * inv_hw
        o_ref[...] = err_mean / (msk_mean + 1e-12)


def masked_l1_pallas(image, warped, mask):
    B, C, H, W = image.shape
    HW = H * W
    tile = _pick_tile(HW)
    grid = (HW // tile,)
    kernel = functools.partial(_masked_l1_kernel,
                               inv_chw=1.0 / float(C * HW),
                               inv_hw=1.0 / float(HW))
    out = pl.pallas_call(
        kernel,
        out_shape=jax.ShapeDtypeStruct((B, 1, 1), jnp.float32),
        grid=grid,
        in_specs=[pl.BlockSpec((B, C, tile), lambda i: (0, 0, i)),
                  pl.BlockSpec((B, C, tile), lambda i: (0, 0, i)),
                  pl.BlockSpec((B, 1, tile), lambda i: (0, 0, i))],
        out_specs=pl.BlockSpec((B, 1, 1), lambda i: (0, 0, 0)),
        scratch_shapes=[pltpu.VMEM((B, 1, 1), jnp.float32),
                        pltpu.VMEM((B, 1, 1), jnp.float32)],
        compiler_params=pltpu.CompilerParams(
            dimension_semantics=("arbitrary",),
            vmem_limit_bytes=32 * 1024 * 1024),
    )(image.reshape(B, C, HW), warped.reshape(B, C, HW),
      mask.reshape(B, 1, HW))
    return out.reshape(B)


# ----------------------------------------------------------------------------
# JAX glue: resizes, warps, SSIM, synthetic flow net
# ----------------------------------------------------------------------------
def avg_pool2(x):  # NCHW, factor-2 average pool
    B, C, H, W = x.shape
    return x.reshape(B, C, H // 2, 2, W // 2, 2).mean(axis=(3, 5))


def _interp_coords(out_size, in_size, align_corners):
    if align_corners:
        if out_size == 1:
            return jnp.zeros((1,), jnp.float32)
        return jnp.arange(out_size, dtype=jnp.float32) * \
            (in_size - 1) / (out_size - 1)
    scale = in_size / out_size
    c = (jnp.arange(out_size, dtype=jnp.float32) + 0.5) * scale - 0.5
    return jnp.clip(c, 0.0, in_size - 1)


def resize_bilinear(x, out_h, out_w, align_corners):
    B, C, H, W = x.shape
    ys = _interp_coords(out_h, H, align_corners)
    xs = _interp_coords(out_w, W, align_corners)
    y0 = jnp.clip(jnp.floor(ys), 0, H - 1)
    x0 = jnp.clip(jnp.floor(xs), 0, W - 1)
    y1 = jnp.clip(y0 + 1, 0, H - 1)
    x1 = jnp.clip(x0 + 1, 0, W - 1)
    wy = (ys - y0)[None, None, :, None]
    wx = (xs - x0)[None, None, None, :]
    y0i, y1i = y0.astype(jnp.int32), y1.astype(jnp.int32)
    x0i, x1i = x0.astype(jnp.int32), x1.astype(jnp.int32)
    top = x[:, :, y0i, :]
    bot = x[:, :, y1i, :]

    def horiz(row):
        return row[:, :, :, x0i] * (1.0 - wx) + row[:, :, :, x1i] * wx

    return horiz(top) * (1.0 - wy) + horiz(bot) * wy


def area_downsample(x, out_h, out_w):
    B, C, H, W = x.shape
    fh, fw = H // out_h, W // out_w
    return x.reshape(B, C, out_h, fh, out_w, fw).mean(axis=(3, 5))


def backwarp(img, flow):
    """Bilinear backward warp. img (B,C,H,W), flow (B,2,H,W) in pixels
    (channel 0 = x / horizontal, channel 1 = y / vertical).  Zeros padding."""
    B, C, H, W = img.shape
    ys, xs = jnp.meshgrid(jnp.arange(H, dtype=jnp.float32),
                          jnp.arange(W, dtype=jnp.float32), indexing='ij')
    x = xs[None] + flow[:, 0]
    y = ys[None] + flow[:, 1]
    valid = ((x >= 0.0) & (x <= W - 1.0) & (y >= 0.0) & (y <= H - 1.0))
    valid = valid.astype(jnp.float32)[:, None]           # (B,1,H,W)
    x0 = jnp.clip(jnp.floor(x), 0, W - 1)
    y0 = jnp.clip(jnp.floor(y), 0, H - 1)
    x1 = jnp.clip(x0 + 1, 0, W - 1)
    y1 = jnp.clip(y0 + 1, 0, H - 1)
    wx = (x - x0)[:, None]
    wy = (y - y0)[:, None]
    x0i, x1i = x0.astype(jnp.int32), x1.astype(jnp.int32)
    y0i, y1i = y0.astype(jnp.int32), y1.astype(jnp.int32)
    flat = img.reshape(B, C, H * W)

    def gather(yi, xi):
        idx = (yi * W + xi).reshape(B, 1, H * W)
        idx = jnp.broadcast_to(idx, (B, C, H * W))
        return jnp.take_along_axis(flat, idx, axis=2).reshape(B, C, H, W)

    out = (gather(y0i, x0i) * (1 - wx) * (1 - wy) +
           gather(y0i, x1i) * wx * (1 - wy) +
           gather(y1i, x0i) * (1 - wx) * wy +
           gather(y1i, x1i) * wx * wy)
    return out * valid


def transformer_fwd(im, flow, out_size):
    """Forward-warp splat (utils.transformerFwd). im (B,H,W,C), flow (B,H,W,2)
    in pixel units."""
    B, H, W, C = im.shape
    Ho, Wo = out_size
    ys, xs = jnp.meshgrid(jnp.arange(H, dtype=jnp.float32),
                          jnp.arange(W, dtype=jnp.float32), indexing='ij')
    x = xs[None] + flow[..., 0]
    y = ys[None] + flow[..., 1]
    x0 = jnp.floor(x)
    y0 = jnp.floor(y)
    wx = x - x0
    wy = y - y0
    bidx = jnp.broadcast_to(jnp.arange(B)[:, None, None], (B, H, W))
    out = jnp.zeros((B, Ho * Wo, C), jnp.float32)
    corners = [(y0, x0, (1 - wx) * (1 - wy)),
               (y0, x0 + 1, wx * (1 - wy)),
               (y0 + 1, x0, (1 - wx) * wy),
               (y0 + 1, x0 + 1, wx * wy)]
    for yc, xc, wgt in corners:
        valid = ((xc >= 0) & (xc <= Wo - 1) & (yc >= 0) & (yc <= Ho - 1))
        w = wgt * valid.astype(jnp.float32)
        xi = jnp.clip(xc, 0, Wo - 1).astype(jnp.int32)
        yi = jnp.clip(yc, 0, Ho - 1).astype(jnp.int32)
        idx = yi * Wo + xi
        out = out.at[bidx, idx].add(im * w[..., None])
    return out.reshape(B, Ho, Wo, C)


def _avg_pool3x3_valid(x):
    return lax.reduce_window(x, 0.0, lax.add, (1, 1, 3, 3),
                             (1, 1, 1, 1), 'VALID') / 9.0


def ssim(x, y):
    # TODO(synk): utils.SSIM padding convention unknown; VALID 3x3 pooling used.
    C1, C2 = 0.01 ** 2, 0.03 ** 2
    mu_x = _avg_pool3x3_valid(x)
    mu_y = _avg_pool3x3_valid(y)
    sig_x = _avg_pool3x3_valid(x * x) - mu_x * mu_x
    sig_y = _avg_pool3x3_valid(y * y) - mu_y * mu_y
    sig_xy = _avg_pool3x3_valid(x * y) - mu_x * mu_y
    n = (2 * mu_x * mu_y + C1) * (2 * sig_xy + C2)
    d = (mu_x * mu_x + mu_y * mu_y + C1) * (sig_x + sig_y + C2)
    return n / d


# ----------------------------------------------------------------------------
# Synthetic Att_PWC_Net stand-in (deterministic weights)
# ----------------------------------------------------------------------------
# TODO(synk): Att_PWC_Net source is not provided; a small deterministic
# PWC-style decoder producing 4 flow maps at 1/4..1/32 resolution is used.
def init_params(key, hidden=16):
    params = {}
    for lvl in range(4):
        key, k1, k2 = jax.random.split(key, 3)
        params[f'w1_{lvl}'] = 0.1 * jax.random.normal(
            k1, (hidden, 6, 3, 3), jnp.float32)
        params[f'b1_{lvl}'] = jnp.zeros((hidden,), jnp.float32)
        params[f'w2_{lvl}'] = 0.1 * jax.random.normal(
            k2, (2, hidden, 3, 3), jnp.float32)
        params[f'b2_{lvl}'] = jnp.zeros((2,), jnp.float32)
    return params


def flow_net(params, ten_first, ten_second):
    f1 = avg_pool2(avg_pool2(ten_first))
    f2 = avg_pool2(avg_pool2(ten_second))
    flows = []
    for lvl in range(4):
        x = jnp.concatenate([f1, f2], axis=1)
        h = conv3x3_pallas(x, params[f'w1_{lvl}'], params[f'b1_{lvl}'],
                           apply_relu=True)                 # fused leaky-relu
        flows.append(conv3x3_pallas(h, params[f'w2_{lvl}'],
                                    params[f'b2_{lvl}'], apply_relu=False))
        if lvl < 3:
            f1 = avg_pool2(f1)
            f2 = avg_pool2(f2)
    return flows  # fine -> coarse: H/4, H/8, H/16, H/32


# ----------------------------------------------------------------------------
# Flow_Model forward
# ----------------------------------------------------------------------------
def consistent_multiscale(flows, flows_inv):
    m_fw, m_bw, c_fw, c_bw = [], [], [], []
    for fw, bw in zip(flows, flows_inv):
        fw_warped = backwarp(bw, fw)
        bw_warped = backwarp(fw, bw)
        mf, mb, cf, cb = consistent_pallas(fw, bw, fw_warped, bw_warped)
        m_fw.append(mf); m_bw.append(mb); c_fw.append(cf); c_bw.append(cb)
    return m_fw, m_bw, c_fw, c_bw


def occ_mask(flow):
    B, _, H, W = flow.shape
    ones = jnp.ones((B, H, W, 1), jnp.float32)
    om = transformer_fwd(ones, flow.transpose(0, 2, 3, 1), (H, W))
    om = jnp.clip(om, 0.0, 1.0)
    return om.transpose(0, 3, 1, 2)


def image_pyramid(image, num_scale):
    _, _, H, W = image.shape
    return [resize_bilinear(image, H // (2 ** s), W // (2 ** s), False)
            for s in range(num_scale)]


def warped_images(images, flows):
    return [backwarp(image, flow) for image, flow in zip(images, flows)]


def loss_L1(pyramid, warped_pyramid, occ_masks):
    cols = [masked_l1_pallas(img, wrp, msk)
            for img, wrp, msk in zip(pyramid, warped_pyramid, occ_masks)]
    return jnp.stack(cols, axis=1).sum(axis=1)


def loss_ssim(pyramid, warped_pyramid, occ_masks):
    cols = []
    for image, warped, msk in zip(pyramid, warped_pyramid, occ_masks):
        err = jnp.clip((1.0 - ssim(image * msk, warped * msk)) / 2.0, 0.0, 1.0)
        err = err.mean(axis=(1, 2, 3)) / (msk.mean(axis=(1, 2, 3)) + 1e-12)
        cols.append(err)
    return jnp.stack(cols, axis=1).sum(axis=1)


def gradients(t):
    dy = t[:, :, 1:, :] - t[:, :, :-1, :]
    dx = t[:, :, :, 1:] - t[:, :, :, :-1]
    return dx, dy


def grad2_error(image, obj):
    w = 10.0
    image_dx, image_dy = gradients(image)
    w_x = jnp.exp(-w * jnp.mean(jnp.abs(image_dx), axis=1, keepdims=True))
    w_y = jnp.exp(-w * jnp.mean(jnp.abs(image_dy), axis=1, keepdims=True))
    dx, dy = gradients(obj)
    ddx, _ = gradients(dx)
    _, ddy = gradients(dy)
    error = ((w_x[:, :, :, 1:] * jnp.abs(ddx))[:, :, 2:, :] +
             (w_y[:, :, 1:, :] * jnp.abs(ddy))[:, :, :, 2:])
    return error / 2.0


def loss_smooth(pyramid, flows):
    cols = []
    for image, flow in zip(pyramid, flows):
        _, _, H, W = flow.shape
        image_small = area_downsample(image, H, W)
        err = grad2_error(image_small, flow / 20.0).mean(axis=(1, 2, 3))
        cols.append(err)
    return jnp.stack(cols, axis=1).sum(axis=1)


def flow_model_forward(params, cfgs, inputs):
    ten_first = inputs[('color', 0)]
    ten_second = inputs[('color', 1)]
    B, _, H, W = ten_first.shape

    # Batched fw/bw flow-net pass: one set of conv kernels at batch 2B.
    stacked_a = jnp.concatenate([ten_first, ten_second], axis=0)
    stacked_b = jnp.concatenate([ten_second, ten_first], axis=0)
    flows_all = flow_net(params, stacked_a, stacked_b)
    flows = [f[:B] for f in flows_all]
    flows_inv = [f[B:] for f in flows_all]

    scales = [1, 2, 4, 8]
    flows_rescale = [resize_bilinear(f * 4.0, H // s, W // s, True)
                     for f, s in zip(flows, scales)]
    flows_inv_rescale = [resize_bilinear(f * 4.0, H // s, W // s, True)
                         for f, s in zip(flows_inv, scales)]

    pyramid_first = image_pyramid(ten_first, len(flows))
    pyramid_second = image_pyramid(ten_second, len(flows_inv))
    warped_pyramid_first = warped_images(pyramid_second, flows_rescale)
    warped_pyramid_second = warped_images(pyramid_first, flows_inv_rescale)

    (consis_mask_fw, consis_mask_bw,
     consis_fw, consis_bw) = consistent_multiscale(flows_rescale,
                                                   flows_inv_rescale)
    backwarp_mask_fw = [occ_mask(f) for f in flows_inv_rescale]
    backwarp_mask_bw = [occ_mask(f) for f in flows_rescale]
    mask_fw = [cm * bm for cm, bm in zip(consis_mask_fw, backwarp_mask_fw)]
    mask_bw = [cm * bm for cm, bm in zip(consis_mask_bw, backwarp_mask_bw)]

    L1_first = loss_L1(pyramid_first, warped_pyramid_first, mask_fw)
    L1_second = loss_L1(pyramid_second, warped_pyramid_second, mask_bw)
    ssim_first = loss_ssim(pyramid_first, warped_pyramid_first, mask_fw)
    ssim_second = loss_ssim(pyramid_second, warped_pyramid_second, mask_bw)
    flow_smooth = loss_smooth(pyramid_first, flows)
    flow_inv_smooth = loss_smooth(pyramid_second, flows_inv)

    losses_pack = collections.OrderedDict()
    losses_pack['F_rec'] = cfgs['w_F_rec'] * (
        0.15 * (L1_first + L1_second).mean() +
        0.85 * (ssim_first + ssim_second).mean())
    losses_pack['F_smth'] = cfgs['w_F_smth'] * \
        (flow_smooth + flow_inv_smooth).mean()
    total_loss = sum(v for _k, v in losses_pack.items())

    if cfgs['model'] == 'flow':
        return losses_pack, total_loss
    return (losses_pack, flows_rescale[0], flows_inv_rescale[0],
            mask_fw[0], mask_bw[0], consis_fw[0], consis_bw[0])


# ----------------------------------------------------------------------------
if __name__ == "__main__":
    key = jax.random.PRNGKey(0)
    k1, k2, kp = jax.random.split(key, 3)
    B, C, H, W = 2, 3, 128, 128   # small but large enough for all 4 scales
    img0 = jax.random.uniform(k1, (B, C, H, W), jnp.float32)
    img1 = jax.random.uniform(k2, (B, C, H, W), jnp.float32)
    params = init_params(kp)
    cfgs = {'w_F_rec': 1.0, 'w_F_smth': 10.0, 'model': 'flow'}
    inputs = {('color', 0): img0, ('color', 1): img1}

    losses_pack, total_loss = flow_model_forward(params, cfgs, inputs)
    jax.block_until_ready(total_loss)
    for v in losses_pack.values():
        jax.block_until_ready(v)
    print("KERNEL_OK")
</pallas_src>

<mosaic_0001>
module attributes {stable_mosaic.version = 11 : i64} {
  func.func @_conv_mm_kernel(%arg0: i32, %arg1: i32, %arg2: memref<16x54xbf16, #tpu.memory_space<vmem>>, %arg3: memref<16x1xf32, #tpu.memory_space<vmem>>, %arg4: memref<1x54x1024xbf16, #tpu.memory_space<vmem>>, %arg5: memref<1x16x1024xf32, #tpu.memory_space<vmem>>) attributes {dimension_semantics = [#tpu.dimension_semantics<parallel>, #tpu.dimension_semantics<parallel>], iteration_bounds = array<i64: 4, 1>, scalar_prefetch = 0 : i64, scratch_operands = 0 : i64, tpu.core_type = #tpu.core_type<tc>, window_params = [{pipeline_mode = #tpu.pipeline_mode<synchronous>, transform_indices = @transform_0, window_bounds = array<i64: 16, 54>}, {pipeline_mode = #tpu.pipeline_mode<synchronous>, transform_indices = @transform_1, window_bounds = array<i64: 16, 1>}, {transform_indices = @transform_2, window_bounds = array<i64: 1, 54, 1024>}, {transform_indices = @transform_3, window_bounds = array<i64: 1, 16, 1024>}]} {
    %c0 = arith.constant 0 : index
    %c0_0 = arith.constant 0 : index
    %0 = vector.load %arg2[%c0, %c0_0] : memref<16x54xbf16, #tpu.memory_space<vmem>>, vector<16x54xbf16>
    %c0_1 = arith.constant 0 : index
    %c0_2 = arith.constant 0 : index
    %c0_3 = arith.constant 0 : index
    %1 = vector.load %arg4[%c0_1, %c0_2, %c0_3] : memref<1x54x1024xbf16, #tpu.memory_space<vmem>>, vector<1x54x1024xbf16>
    %2 = vector.shape_cast %1 : vector<1x54x1024xbf16> to vector<54x1024xbf16>
    %cst = arith.constant dense<0.000000e+00> : vector<16x1024xf32>
    %3 = tpu.matmul %0, %2, %cst {dimension_numbers = #tpu.dot_dimension_numbers<[1], [0], [0], [1], [0, 0, 1, 1], [], []>} : vector<16x54xbf16>, vector<54x1024xbf16>, vector<16x1024xf32> -> vector<16x1024xf32>
    %c0_4 = arith.constant 0 : index
    %c0_5 = arith.constant 0 : index
    %4 = vector.load %arg3[%c0_4, %c0_5] : memref<16x1xf32, #tpu.memory_space<vmem>>, vector<16x1xf32>
    %5 = vector.broadcast %4 : vector<16x1xf32> to vector<16x1024xf32>
    %6 = arith.addf %3, %5 : vector<16x1024xf32>
    %cst_6 = arith.constant 0.000000e+00 : f32
    %7 = vector.broadcast %cst_6 : f32 to vector<16x1024xf32>
    %8 = arith.cmpf ogt, %6, %7 : vector<16x1024xf32>
    %cst_7 = arith.constant 1.000000e-01 : f32
    %9 = vector.broadcast %cst_7 : f32 to vector<16x1024xf32>
    %10 = arith.mulf %9, %6 : vector<16x1024xf32>
    %11 = arith.select %8, %6, %10 : vector<16x1024xi1>, vector<16x1024xf32>
    %c0_8 = arith.constant 0 : index
    %c0_9 = arith.constant 0 : index
    %c0_10 = arith.constant 0 : index
    %12 = vector.load %arg5[%c0_8, %c0_9, %c0_10] : memref<1x16x1024xf32, #tpu.memory_space<vmem>>, vector<1x16x1024xf32>
    %13 = vector.shape_cast %12 : vector<1x16x1024xf32> to vector<16x1024xf32>
    %14 = vector.shape_cast %11 : vector<16x1024xf32> to vector<1x16x1024xf32>
    tpu.vector_store %arg5[%c0_8, %c0_9, %c0_10], %14 {strides = array<i32>} : memref<1x16x1024xf32, #tpu.memory_space<vmem>>, vector<1x16x1024xf32>,
    return
  }
  func.func @transform_0(%arg0: i32, %arg1: i32) -> (i32, i32) {
    %c0_i32 = arith.constant 0 : i32
    %c0_i32_0 = arith.constant 0 : i32
    %c0_i32_1 = arith.constant 0 : i32
    return %c0_i32, %c0_i32_0 : i32, i32
  }
  func.func @transform_1(%arg0: i32, %arg1: i32) -> (i32, i32) {
    %c0_i32 = arith.constant 0 : i32
    %c0_i32_0 = arith.constant 0 : i32
    %c0_i32_1 = arith.constant 0 : i32
    return %c0_i32, %c0_i32_0 : i32, i32
  }
  func.func @transform_2(%arg0: i32, %arg1: i32) -> (i32, i32, i32) {
    %c0_i32 = arith.constant 0 : i32
    %c0_i32_0 = arith.constant 0 : i32
    return %arg0, %c0_i32, %arg1 : i32, i32, i32
  }
  func.func @transform_3(%arg0: i32, %arg1: i32) -> (i32, i32, i32) {
    %c0_i32 = arith.constant 0 : i32
    %c0_i32_0 = arith.constant 0 : i32
    return %arg0, %c0_i32, %arg1 : i32, i32, i32
  }
}

</mosaic_0001>

<llo_original>
// kernel: tpu_custom_call.1
$region0: #{tpu_custom_call.1}
  #allocation0 [shape = 'u32[]', space=smem, size = 0x4, offset = 0x4, fixed_abs, tag = 'smem constant byte address 0x4 - core index']
  #allocation1 [shape = 'u32[72,128]{1,0:T(1,128)}', space=vmem, size = 0x9000, scoped, tag = 'internal scratch']
  %s0 = inlined_call_operand.vmem [shape: bf16[16,54], index: 0, kind: input, shape index: {}]
  %s1 = inlined_call_operand.vmem [shape: f32[16,1], index: 1, kind: input, shape index: {}]
  %s2 = inlined_call_operand.vmem [shape: bf16[4,54,1024], index: 2, kind: input, shape index: {}]
  %s3 = inlined_call_operand.hbm [shape: f32[4,16,1024], index: 3, kind: output, shape index: {}]
  %s4 = sld [smem:[#allocation0]]
  $region45: #{tpu_custom_call.1} parent=0
    _
  %s6 = ssub.s32 1, %s4
  %s7 = scalar_select 0, %s6, %s4
  $region1: #{tpu_custom_call.1} parent=0
    #allocation2 [shape = 'u8[131072]{0}', space=vmem, size = 0x20000, scoped, tag = 'output window, operand 0']
    #allocation3 [shape = 's32[2]{0}', space=sflag, size = 0x8, scoped, tag = 'scoped memory for tpu_custom_call.1']
    %8 = vsyncpa [#allocation3], 0
    %s9 = scalar_lea.sflag [#allocation3], 1
    %10 = vsyncpa %s9, 0
    loop: start=0, step=1, limit=6
    $region2: #{tpu_custom_call.1} parent=1 // loop_pre_header
      _
    $region3: #{tpu_custom_call.1} parent=1 // loop_header
      %s12 = sphi 0, %s16
      %p13 = scmp.ge.s32.totalorder %s12, 6
      %s19 = sphi 0, %s31
      %s20 = sphi 0, %s27
      %s21 = sphi 0, %s19
      %s22 = sphi 0, %s20
      %s23 = sphi 0, %s21
      %s24 = sphi 0, %s22
      %s32 = sphi 0, %s32
      %s34 = sphi 0, %s32
      %s35 = sphi 0, %s34
      %s49 = sphi 0, %s35
      %s53 = sphi 0, %s53
      %s55 = sphi 0, %s53
      %s56 = sphi 0, %s55
      %s70 = sphi 0, %s56
      %s78 = sphi 0, %s80
      %s81 = sphi 0, %s78
      %s82 = sphi 0, %s81
      %s98 = sphi 0, %s82
      %s106 = sphi 0, %s108
      %s109 = sphi 0, %s106
      %s110 = sphi 0, %s109
      %s126 = sphi 0, %s110
    $region4: #{tpu_custom_call.1} parent=1 // loop_header_branch
      %15 = sbr.rel (%p13) target = $region8
    $region5: #{tpu_custom_call.1} parent=1 // loop_body
      %s17 = ssub.s32 %s12, 1
      %s18 = ssub.s32 %s12, 2
      %s25 = sadd.s32 1, %s20
      %p26 = scmp.ge.s32.totalorder %s25, 1
      %s27 = scalar_select %p26, 0, %s25
      %s28 = sadd.s32 1, %s19
      %s29 = scalar_select %p26, %s28, %s19
      %p30 = scmp.ge.s32.totalorder %s29, 4
      %s31 = scalar_select %p30, 0, %s29
      %s33 = sadd.s32 %s32, 1
      %p36 = scmp.eq.s32.totalorder %s12, 3
      %p37 = scmp.ne.s32.totalorder %s32, %s34
      %p38 = scmp.eq.s32.totalorder %s12, 0
      %p39 = por %p37, %p38
      %p40 = scmp.ne.s32.totalorder %s32, %s34
      %p41 = scmp.eq.s32.totalorder %s17, 3
      %p42 = por %p40, %p41
      %p43 = scmp.ne.s32.totalorder %s34, %s35
      %p44 = scmp.eq.s32.totalorder %s17, 0
      %p45 = por %p43, %p44
      %p46 = scmp.ne.s32.totalorder %s34, %s35
      %p47 = scmp.eq.s32.totalorder %s18, 3
      %p48 = por %p46, %p47
      %p50 = scmp.ne.s32.totalorder %s35, %s49
      %p51 = scmp.eq.s32.totalorder %s18, 0
      %p52 = por %p50, %p51
      %s54 = sadd.s32 %s53, 1
      %p57 = scmp.eq.s32.totalorder %s12, 3
      %p58 = scmp.ne.s32.totalorder %s53, %s55
      %p59 = scmp.eq.s32.totalorder %s12, 0
      %p60 = por %p58, %p59
      %p61 = scmp.ne.s32.totalorder %s53, %s55
      %p62 = scmp.eq.s32.totalorder %s17, 3
      %p63 = por %p61, %p62
      %p64 = scmp.ne.s32.totalorder %s55, %s56
      %p65 = scmp.eq.s32.totalorder %s17, 0
      %p66 = por %p64, %p65
      %p67 = scmp.ne.s32.totalorder %s55, %s56
      %p68 = scmp.eq.s32.totalorder %s18, 3
      %p69 = por %p67, %p68
      %p71 = scmp.ne.s32.totalorder %s56, %s70
      %p72 = scmp.eq.s32.totalorder %s18, 0
      %p73 = por %p71, %p72
      %s74 = ssub.s32 %s19, %s31
      %s75 = ssub.s32 %s20, %s27
      %s76 = sor.u32 %s74, %s75
      %p77 = scmp.eq.s32.totalorder %s76, 0
      %s79 = sadd.s32 %s78, 1
      %s80 = scalar_select %p77, %s78, %s79
      %p83 = pneg %p77
      %p84 = scmp.eq.s32.totalorder %s12, 3
      %p85 = por %p83, %p84
      %p86 = scmp.ne.s32.totalorder %s78, %s81
      %p87 = scmp.eq.s32.totalorder %s12, 0
      %p88 = por %p86, %p87
      %p89 = scmp.ne.s32.totalorder %s78, %s81
      %p90 = scmp.eq.s32.totalorder %s17, 3
      %p91 = por %p89, %p90
      %p92 = scmp.ne.s32.totalorder %s81, %s82
      %p93 = scmp.eq.s32.totalorder %s17, 0
      %p94 = por %p92, %p93
      %p95 = scmp.ne.s32.totalorder %s81, %s82
      %p96 = scmp.eq.s32.totalorder %s18, 3
      %p97 = por %p95, %p96
      %p99 = scmp.ne.s32.totalorder %s82, %s98
      %p100 = scmp.eq.s32.totalorder %s18, 0
      %p101 = por %p99, %p100
      %s102 = ssub.s32 %s19, %s31
      %s103 = ssub.s32 %s20, %s27
      %s104 = sor.u32 %s102, %s103
      %p105 = scmp.eq.s32.totalorder %s104, 0
      %s107 = sadd.s32 %s106, 1
      %s108 = scalar_select %p105, %s106, %s107
      %p111 = pneg %p105
      %p112 = scmp.eq.s32.totalorder %s12, 3
      %p113 = por %p111, %p112
      %p114 = scmp.ne.s32.totalorder %s106, %s109
      %p115 = scmp.eq.s32.totalorder %s12, 0
      %p116 = por %p114, %p115
      %p117 = scmp.ne.s32.totalorder %s106, %s109
      %p118 = scmp.eq.s32.totalorder %s17, 3
      %p119 = por %p117, %p118
      %p120 = scmp.ne.s32.totalorder %s109, %s110
      %p121 = scmp.eq.s32.totalorder %s17, 0
      %p122 = por %p120, %p121
      %p123 = scmp.ne.s32.totalorder %s109, %s110
      %p124 = scmp.eq.s32.totalorder %s18, 3
      %p125 = por %p123, %p124
      %p127 = scmp.ne.s32.totalorder %s110, %s126
      %p128 = scmp.eq.s32.totalorder %s18, 0
      %p129 = por %p127, %p128
      %p130 = scmp.le.s32.totalorder 1, %s12
      %p131 = scmp.lt.s32.totalorder %s12, 5
      %p132 = pnand %p130, %p131
      %p133 = pneg %p132
      // Predicated region
      $region9: #{tpu_custom_call.1} parent=5 // pred_check
        _
      $region10: #{tpu_custom_call.1} parent=5 // pred_check_branch
        %135 = sbr.rel (%p132) target = $region12
      $region11: #{tpu_custom_call.1} parent=5 // pred_region
        %s136 = ssub.s32 %s12, 1
        // Predicated region
        $region13: #{tpu_custom_call.1} parent=11 // pred_check
          %p137 = pneg %p45
        $region14: #{tpu_custom_call.1} parent=11 // pred_check_branch
          %139 = sbr.rel (%p137) target = $region16
        $region15: #{tpu_custom_call.1} parent=11 // pred_region
          _
        $region16: #{tpu_custom_call.1} parent=11 // pred_fallthru
          _
        // Predicated region
        $region17: #{tpu_custom_call.1} parent=11 // pred_check
          %p140 = pneg %p66
        $region18: #{tpu_custom_call.1} parent=11 // pred_check_branch
          %142 = sbr.rel (%p140) target = $region20
        $region19: #{tpu_custom_call.1} parent=11 // pred_region
          _
        $region20: #{tpu_custom_call.1} parent=11 // pred_fallthru
          _
      $region12: #{tpu_custom_call.1} parent=5 // pred_fallthru
        _
      %p143 = scmp.lt.s32.totalorder %s12, 4
      // Predicated region
      $region21: #{tpu_custom_call.1} parent=5 // pred_check
        %p144 = pneg %p143
      $region22: #{tpu_custom_call.1} parent=5 // pred_check_branch
        %146 = sbr.rel (%p144) target = $region24
      $region23: #{tpu_custom_call.1} parent=5 // pred_region
        // Predicated region
        $region25: #{tpu_custom_call.1} parent=23 // pred_check
          %p147 = pneg %p88
        $region26: #{tpu_custom_call.1} parent=23 // pred_check_branch
          %149 = sbr.rel (%p147) target = $region28
        $region27: #{tpu_custom_call.1} parent=23 // pred_region
          %s150 = smul.u32 8, %s20
          %p151 = scmp.lt.s32.totalorder %s19, 3
          %s152 = scalar_select %p151, %s19, 3
          %p153 = scmp.lt.s32.totalorder %s150, 7
          %s154 = scalar_select %p153, %s150, 7
          %s155 = smul.addr %s152, 56
          %s156 = sadd.s32 %s154, %s155
          %s157 = smul.addr %s156, 4
          %s158 = scalar_lea.vmem %s2, %s157
          %s159 = smul.u32 8, %s20
        $region28: #{tpu_custom_call.1} parent=23 // pred_fallthru
          _
      $region24: #{tpu_custom_call.1} parent=5 // pred_fallthru
        _
      %p160 = scmp.le.s32.totalorder 1, %s12
      %p161 = scmp.lt.s32.totalorder %s12, 5
      %p162 = pnand %p160, %p161
      %p163 = pneg %p162
      // Predicated region
      $region29: #{tpu_custom_call.1} parent=5 // pred_check
        _
      $region30: #{tpu_custom_call.1} parent=5 // pred_check_branch
        %165 = sbr.rel (%p162) target = $region32
      $region31: #{tpu_custom_call.1} parent=5 // pred_region
        %s166 = ssub.s32 %s12, 1
        %p167 = pneg %p45
        %p168 = pneg %p42
        %p169 = pneg %p66
        %p170 = pneg %p63
        %s171 = smul.u32 8, %s22
        %p172 = scmp.lt.s32.totalorder %s21, 3
        %s173 = scalar_select %p172, %s21, 3
        %p174 = scmp.lt.s32.totalorder %s171, 7
        %s175 = scalar_select %p174, %s171, 7
        %s176 = smul.addr %s173, 56
        %s177 = sadd.s32 %s175, %s176
        %s178 = smul.addr %s177, 4
        %s179 = scalar_lea.vmem %s2, %s178
        %p180 = pneg %p94
        %p181 = pneg %p91
        %p182 = pneg %p122
        %p183 = pneg %p119
        %s184 = sand.u32 %s109, 1
        %s185 = scalar_lea.sflag [#allocation3], %s184
        %s186 = sand.u32 %s109, 1
        %s187 = smul.addr %s186, 128
        %s188 = scalar_lea.vmem [#allocation2], %s187
        %s189 = smul.u32 8, %s22
        %p190 = scmp.lt.s32.totalorder %s21, 3
        %s191 = scalar_select %p190, %s21, 3
        %p192 = scmp.lt.s32.totalorder %s189, 7
        %s193 = scalar_select %p192, %s189, 7
        %s194 = smul.addr %s191, 56
        %s195 = sadd.s32 %s193, %s194
        %s196 = smul.addr %s195, 4
        %s197 = scalar_lea.vmem %s2, %s196
        %s198 = smul.u32 8, %s22
        %s199 = smul.u32 8, %s22
        %v201 = vld [vmem:[%s0] sm:$0xf]
        %v202 = vld [vmem:[%s0 + $0x4] sm:$0xf]
        %v203 = vld [vmem:[%s197] sm:$0xff]
        %v204 = vld [vmem:[%s197 + $0x8] sm:$0xff]
        %v205 = vld [vmem:[%s197 + $0x10] sm:$0xff]
        %v206 = vld [vmem:[%s197 + $0x18] sm:$0xff]
        %v207 = vld [vmem:[%s197 + $0x20] sm:$0xff]
        %v208 = vld [vmem:[%s197 + $0x28] sm:$0xff]
        %v209 = vld [vmem:[%s197 + $0x30] sm:$0xff]
        %v210 = vld [vmem:[%s197 + $0x38] sm:$0xff]
        %v211 = vld [vmem:[%s197 + $0x40] sm:$0xff]
        %v212 = vld [vmem:[%s197 + $0x48] sm:$0xff]
        %v213 = vld [vmem:[%s197 + $0x50] sm:$0xff]
        %v214 = vld [vmem:[%s197 + $0x58] sm:$0xff]
        %v215 = vld [vmem:[%s197 + $0x60] sm:$0xff]
        %v216 = vld [vmem:[%s197 + $0x68] sm:$0xff]
        %v217 = vld [vmem:[%s197 + $0x70] sm:$0xff]
        %v218 = vld [vmem:[%s197 + $0x78] sm:$0xff]
        %v219 = vld [vmem:[%s197 + $0x80] sm:$0xff]
        %v220 = vld [vmem:[%s197 + $0x88] sm:$0xff]
        %v221 = vld [vmem:[%s197 + $0x90] sm:$0xff]
        %v222 = vld [vmem:[%s197 + $0x98] sm:$0xff]
        %v223 = vld [vmem:[%s197 + $0xa0] sm:$0xff]
        %v224 = vld [vmem:[%s197 + $0xa8] sm:$0xff]
        %v225 = vld [vmem:[%s197 + $0xb0] sm:$0xff]
        %v226 = vld [vmem:[%s197 + $0xb8] sm:$0xff]
        %v227 = vld [vmem:[%s197 + $0xc0] sm:$0x77]
        %v228 = vld [vmem:[%s197 + $0xc8] sm:$0x77]
        %v229 = vld [vmem:[%s197 + $0xd0] sm:$0x77]
        %v230 = vld [vmem:[%s197 + $0xd8] sm:$0x77]
        %v231 = vld [vmem:[%s1] sm:$0xff]
        %v232 = vld [vmem:[%s1 + $0x8] sm:$0xff]
        %234 = vset.pattern.permute.xlu0 0
        %235 = vperm.xlu0 %234, %v231
        %v236 = vpop.permute.xlu0 %235
        %239 = vset.pattern.permute.xlu0 0
        %240 = vperm.xlu0 %239, %v232
        %v241 = vpop.permute.xlu0 %240
        %v245 = vunpack.c.l.b16 %v201
        %v246 = vunpack.c.l.b16 %v202
        %v247 = vpack.c.b16 %v246, %v245
        %v276 = vunpack.c.l.b16 %v203
        %v277 = vunpack.c.h.b16 %v203
        %v278 = vunpack.c.l.b16 %v204
        %v279 = vunpack.c.h.b16 %v204
        %v280 = vunpack.c.l.b16 %v205
        %v281 = vunpack.c.h.b16 %v205
        %v282 = vunpack.c.l.b16 %v206
        %v283 = vunpack.c.h.b16 %v206
        %v284 = vunpack.c.l.b16 %v207
        %v285 = vunpack.c.h.b16 %v207
        %v286 = vunpack.c.l.b16 %v208
        %v287 = vunpack.c.h.b16 %v208
        %v288 = vunpack.c.l.b16 %v209
        %v289 = vunpack.c.h.b16 %v209
        %v290 = vunpack.c.l.b16 %v210
        %v291 = vunpack.c.h.b16 %v210
        %v292 = vunpack.c.l.b16 %v211
        %v293 = vunpack.c.h.b16 %v211
        %v294 = vunpack.c.l.b16 %v212
        %v295 = vunpack.c.h.b16 %v212
        %v296 = vunpack.c.l.b16 %v213
        %v297 = vunpack.c.h.b16 %v213
        %v298 = vunpack.c.l.b16 %v214
        %v299 = vunpack.c.h.b16 %v214
        %v300 = vunpack.c.l.b16 %v215
        %v301 = vunpack.c.h.b16 %v215
        %v302 = vunpack.c.l.b16 %v216
        %v303 = vunpack.c.h.b16 %v216
        %v304 = vunpack.c.l.b16 %v217
        %v305 = vunpack.c.h.b16 %v217
        %v306 = vunpack.c.l.b16 %v218
        %v307 = vunpack.c.h.b16 %v218
        %v308 = vunpack.c.l.b16 %v219
        %v309 = vunpack.c.h.b16 %v219
        %v310 = vunpack.c.l.b16 %v220
        %v311 = vunpack.c.h.b16 %v220
        %v312 = vunpack.c.l.b16 %v221
        %v313 = vunpack.c.h.b16 %v221
        %v314 = vunpack.c.l.b16 %v222
        %v315 = vunpack.c.h.b16 %v222
        %v316 = vunpack.c.l.b16 %v223
        %v317 = vunpack.c.h.b16 %v223
        %v318 = vunpack.c.l.b16 %v224
        %v319 = vunpack.c.h.b16 %v224
        %v320 = vunpack.c.l.b16 %v225
        %v321 = vunpack.c.h.b16 %v225
        %v322 = vunpack.c.l.b16 %v226
        %v323 = vunpack.c.h.b16 %v226
        %v324 = vunpack.c.l.b16 %v227
        %v325 = vunpack.c.h.b16 %v227
        %v326 = vunpack.c.l.b16 %v228
        %v327 = vunpack.c.h.b16 %v228
        %v328 = vunpack.c.l.b16 %v229
        %v329 = vunpack.c.h.b16 %v229
        %v330 = vunpack.c.l.b16 %v230
        %v331 = vunpack.c.h.b16 %v230
        %v332 = vpack.c.b16 %v284, %v276
        %v333 = vpack.c.b16 %v285, %v277
        %v334 = vpack.c.b16 %v286, %v278
        %v335 = vpack.c.b16 %v287, %v279
        %v336 = vpack.c.b16 %v288, %v280
        %v337 = vpack.c.b16 %v289, %v281
        %v338 = vpack.c.b16 %v290, %v282
        %v339 = vpack.c.b16 %v291, %v283
        %v340 = vpack.c.b16 %v300, %v292
        %v341 = vpack.c.b16 %v301, %v293
        %v342 = vpack.c.b16 %v302, %v294
        %v343 = vpack.c.b16 %v303, %v295
        %v344 = vpack.c.b16 %v304, %v296
        %v345 = vpack.c.b16 %v305, %v297
        %v346 = vpack.c.b16 %v306, %v298
        %v347 = vpack.c.b16 %v307, %v299
        %v348 = vpack.c.b16 %v316, %v308
        %v349 = vpack.c.b16 %v317, %v309
        %v350 = vpack.c.b16 %v318, %v310
        %v351 = vpack.c.b16 %v319, %v311
        %v352 = vpack.c.b16 %v320, %v312
        %v353 = vpack.c.b16 %v321, %v313
        %v354 = vpack.c.b16 %v322, %v314
        %v355 = vpack.c.b16 %v323, %v315
        %v356 = vpack.c.b16 %v324, %v324
        %v357 = vpack.c.b16 %v325, %v325
        %v358 = vpack.c.b16 %v326, %v326
        %v359 = vpack.c.b16 %v327, %v327
        %v360 = vpack.c.b16 %v328, %v328
        %v361 = vpack.c.b16 %v329, %v329
        %v362 = vpack.c.b16 %v330, %v330
        %v363 = vpack.c.b16 %v331, %v331
        %vm388 = vcmask 441344
        %v390 = vsel %vm388, %v247, 0
        %vm392 = vcmask 1042432
        %v394 = vsel %vm392, %v356, 0
        %v397 = vsel %vm392, %v357, 0
        %v400 = vsel %vm392, %v358, 0
        %v403 = vsel %vm392, %v359, 0
        %v406 = vsel %vm392, %v360, 0
        %v409 = vsel %vm392, %v361, 0
        %v412 = vsel %vm392, %v362, 0
        %v415 = vsel %vm392, %v363, 0
        %417 = vmatpush.bf16.msra.mxu0 0
        %418 = vmatpush.bf16.msra.mxu0 0
        %419 = vmatpush.bf16.msra.mxu0 0
        %420 = vmatpush.bf16.msra.mxu0 0
        %421 = vmatpush.bf16.msra.mxu0 %v394
        %422 = vmatpush.bf16.msra.mxu0 %v348
        %423 = vmatpush.bf16.msra.mxu0 %v340
        %424 = vmatpush.bf16.msra.mxu0 %v332
        %425 = vmatmul.bf16.gmra.mxu0 %v390
        %v426 = vpop.f32.mrf.mxu0
        %v427 = vadd.f32 %v236, %v426
        %v428 = vpop.f32.mrf.mxu0
        %v429 = vadd.f32 %v241, %v428
        %430 = vdwg.mxu0
        %431 = vmatpush.bf16.msra.mxu0 0
        %432 = vmatpush.bf16.msra.mxu0 0
        %433 = vmatpush.bf16.msra.mxu0 0
        %434 = vmatpush.bf16.msra.mxu0 0
        %435 = vmatpush.bf16.msra.mxu0 %v397
        %436 = vmatpush.bf16.msra.mxu0 %v349
        %437 = vmatpush.bf16.msra.mxu0 %v341
        %438 = vmatpush.bf16.msra.mxu0 %v333
        %439 = vmatmul.bf16.gmra.mxu0 %v390
        %v440 = vpop.f32.mrf.mxu0
        %v441 = vadd.f32 %v236, %v440
        %v442 = vpop.f32.mrf.mxu0
        %v443 = vadd.f32 %v241, %v442
        %444 = vdwg.mxu0
        %445 = vmatpush.bf16.msra.mxu0 0
        %446 = vmatpush.bf16.msra.mxu0 0
        %447 = vmatpush.bf16.msra.mxu0 0
        %448 = vmatpush.bf16.msra.mxu0 0
        %449 = vmatpush.bf16.msra.mxu0 %v400
        %450 = vmatpush.bf16.msra.mxu0 %v350
        %451 = vmatpush.bf16.msra.mxu0 %v342
        %452 = vmatpush.bf16.msra.mxu0 %v334
        %453 = vmatmul.bf16.gmra.mxu0 %v390
        %v454 = vpop.f32.mrf.mxu0
        %v455 = vadd.f32 %v236, %v454
        %v456 = vpop.f32.mrf.mxu0
        %v457 = vadd.f32 %v241, %v456
        %458 = vdwg.mxu0
        %459 = vmatpush.bf16.msra.mxu0 0
        %460 = vmatpush.bf16.msra.mxu0 0
        %461 = vmatpush.bf16.msra.mxu0 0
        %462 = vmatpush.bf16.msra.mxu0 0
        %463 = vmatpush.bf16.msra.mxu0 %v403
        %464 = vmatpush.bf16.msra.mxu0 %v351
        %465 = vmatpush.bf16.msra.mxu0 %v343
        %466 = vmatpush.bf16.msra.mxu0 %v335
        %467 = vmatmul.bf16.gmra.mxu0 %v390
        %v468 = vpop.f32.mrf.mxu0
        %v469 = vadd.f32 %v236, %v468
        %v470 = vpop.f32.mrf.mxu0
        %v471 = vadd.f32 %v241, %v470
        %472 = vdwg.mxu0
        %473 = vmatpush.bf16.msra.mxu0 0
        %474 = vmatpush.bf16.msra.mxu0 0
        %475 = vmatpush.bf16.msra.mxu0 0
        %476 = vmatpush.bf16.msra.mxu0 0
        %477 = vmatpush.bf16.msra.mxu0 %v406
        %478 = vmatpush.bf16.msra.mxu0 %v352
        %479 = vmatpush.bf16.msra.mxu0 %v344
        %480 = vmatpush.bf16.msra.mxu0 %v336
        %481 = vmatmul.bf16.gmra.mxu0 %v390
        %v482 = vpop.f32.mrf.mxu0
        %v483 = vadd.f32 %v236, %v482
        %v484 = vpop.f32.mrf.mxu0
        %v485 = vadd.f32 %v241, %v484
        %486 = vdwg.mxu0
        %487 = vmatpush.bf16.msra.mxu0 0
        %488 = vmatpush.bf16.msra.mxu0 0
        %489 = vmatpush.bf16.msra.mxu0 0
        %490 = vmatpush.bf16.msra.mxu0 0
        %491 = vmatpush.bf16.msra.mxu0 %v409
        %492 = vmatpush.bf16.msra.mxu0 %v353
        %493 = vmatpush.bf16.msra.mxu0 %v345
        %494 = vmatpush.bf16.msra.mxu0 %v337
        %495 = vmatmul.bf16.gmra.mxu0 %v390
        %v496 = vpop.f32.mrf.mxu0
        %v497 = vadd.f32 %v236, %v496
        %v498 = vpop.f32.mrf.mxu0
        %v499 = vadd.f32 %v241, %v498
        %500 = vdwg.mxu0
        %501 = vmatpush.bf16.msra.mxu0 0
        %502 = vmatpush.bf16.msra.mxu0 0
        %503 = vmatpush.bf16.msra.mxu0 0
        %504 = vmatpush.bf16.msra.mxu0 0
        %505 = vmatpush.bf16.msra.mxu0 %v412
        %506 = vmatpush.bf16.msra.mxu0 %v354
        %507 = vmatpush.bf16.msra.mxu0 %v346
        %508 = vmatpush.bf16.msra.mxu0 %v338
        %509 = vmatmul.bf16.gmra.mxu0 %v390
        %v510 = vpop.f32.mrf.mxu0
        %v511 = vadd.f32 %v236, %v510
        %v512 = vpop.f32.mrf.mxu0
        %v513 = vadd.f32 %v241, %v512
        %514 = vdwg.mxu0
        %515 = vmatpush.bf16.msra.mxu0 0
        %516 = vmatpush.bf16.msra.mxu0 0
        %517 = vmatpush.bf16.msra.mxu0 0
        %518 = vmatpush.bf16.msra.mxu0 0
        %519 = vmatpush.bf16.msra.mxu0 %v415
        %520 = vmatpush.bf16.msra.mxu0 %v355
        %521 = vmatpush.bf16.msra.mxu0 %v347
        %522 = vmatpush.bf16.msra.mxu0 %v339
        %523 = vmatmul.bf16.gmra.mxu0 %v390
        %v524 = vpop.f32.mrf.mxu0
        %v525 = vadd.f32 %v236, %v524
        %v526 = vpop.f32.mrf.mxu0
        %v527 = vadd.f32 %v241, %v526
        %528 = vdwg.mxu0
        %vm529 = vcmp.gt.f32.partialorder %v427, 0.0
        %vm530 = vcmp.gt.f32.partialorder %v441, 0.0
        %vm531 = vcmp.gt.f32.partialorder %v455, 0.0
        %vm532 = vcmp.gt.f32.partialorder %v469, 0.0
        %vm533 = vcmp.gt.f32.partialorder %v483, 0.0
        %vm534 = vcmp.gt.f32.partialorder %v497, 0.0
        %vm535 = vcmp.gt.f32.partialorder %v511, 0.0
        %vm536 = vcmp.gt.f32.partialorder %v525, 0.0
        %vm537 = vcmp.gt.f32.partialorder %v429, 0.0
        %vm538 = vcmp.gt.f32.partialorder %v443, 0.0
        %vm539 = vcmp.gt.f32.partialorder %v457, 0.0
        %vm540 = vcmp.gt.f32.partialorder %v471, 0.0
        %vm541 = vcmp.gt.f32.partialorder %v485, 0.0
        %vm542 = vcmp.gt.f32.partialorder %v499, 0.0
        %vm543 = vcmp.gt.f32.partialorder %v513, 0.0
        %vm544 = vcmp.gt.f32.partialorder %v527, 0.0
        %v545 = vmul.f32 %v427, 0.1
        %v546 = vmul.f32 %v441, 0.1
        %v547 = vmul.f32 %v455, 0.1
        %v548 = vmul.f32 %v469, 0.1
        %v549 = vmul.f32 %v483, 0.1
        %v550 = vmul.f32 %v497, 0.1
        %v551 = vmul.f32 %v511, 0.1
        %v552 = vmul.f32 %v525, 0.1
        %v553 = vmul.f32 %v429, 0.1
        %v554 = vmul.f32 %v443, 0.1
        %v555 = vmul.f32 %v457, 0.1
        %v556 = vmul.f32 %v471, 0.1
        %v557 = vmul.f32 %v485, 0.1
        %v558 = vmul.f32 %v499, 0.1
        %v559 = vmul.f32 %v513, 0.1
        %v560 = vmul.f32 %v527, 0.1
        %v561 = vsel %vm529, %v427, %v545
        %v562 = vsel %vm530, %v441, %v546
        %v563 = vsel %vm531, %v455, %v547
        %v564 = vsel %vm532, %v469, %v548
        %v565 = vsel %vm533, %v483, %v549
        %v566 = vsel %vm534, %v497, %v550
        %v567 = vsel %vm535, %v511, %v551
        %v568 = vsel %vm536, %v525, %v552
        %v569 = vsel %vm537, %v429, %v553
        %v570 = vsel %vm538, %v443, %v554
        %v571 = vsel %vm539, %v457, %v555
        %v572 = vsel %vm540, %v471, %v556
        %v573 = vsel %vm541, %v485, %v557
        %v574 = vsel %vm542, %v499, %v558
        %v575 = vsel %vm543, %v513, %v559
        %v576 = vsel %vm544, %v527, %v560
        %577 = vst [vmem:[%s188] sm:$0xff] %v561
        %578 = vst [vmem:[%s188 + $0x8] sm:$0xff] %v562
        %579 = vst [vmem:[%s188 + $0x10] sm:$0xff] %v563
        %580 = vst [vmem:[%s188 + $0x18] sm:$0xff] %v564
        %581 = vst [vmem:[%s188 + $0x20] sm:$0xff] %v565
        %582 = vst [vmem:[%s188 + $0x28] sm:$0xff] %v566
        %583 = vst [vmem:[%s188 + $0x30] sm:$0xff] %v567
        %584 = vst [vmem:[%s188 + $0x38] sm:$0xff] %v568
        %585 = vst [vmem:[%s188 + $0x40] sm:$0xff] %v569
        %586 = vst [vmem:[%s188 + $0x48] sm:$0xff] %v570
        %587 = vst [vmem:[%s188 + $0x50] sm:$0xff] %v571
        %588 = vst [vmem:[%s188 + $0x58] sm:$0xff] %v572
        %589 = vst [vmem:[%s188 + $0x60] sm:$0xff] %v573
        %590 = vst [vmem:[%s188 + $0x68] sm:$0xff] %v574
        %591 = vst [vmem:[%s188 + $0x70] sm:$0xff] %v575
        %592 = vst [vmem:[%s188 + $0x78] sm:$0xff] %v576
        %s593 = sand.u32 %s109, 1
        %s594 = scalar_lea.sflag [#allocation3], %s593
        %s595 = sand.u32 %s109, 1
        %s596 = smul.addr %s595, 128
        %s597 = scalar_lea.vmem [#allocation2], %s596
        // Predicated region
        $region33: #{tpu_custom_call.1} parent=31 // pred_check
          %p598 = pneg %p119
        $region34: #{tpu_custom_call.1} parent=31 // pred_check_branch
          %600 = sbr.rel (%p598) target = $region36
        $region35: #{tpu_custom_call.1} parent=31 // pred_region
          %s601 = smul.u32 8, %s22
          %603 = vsyncadd %s594, 0
          %s604 = smul.addr %s21, 16
          %s605 = sadd.s32 %s601, %s604
          %s606 = smul.addr %s605, 8
          %s607 = scalar_lea.hbm %s3, %s606
          %s608 = sshll.u32 %s597, 4
          %s609 = int_to_ptr.vmem [resolvable:$true] %s608
          %s610 = sshll.u32 %s607, 4
          %s611 = int_to_ptr.hbm [resolvable:$true] %s610
          %616 = dma.vmem_to_hbm [thread:$0]  %s609, 2048, %s611, %s594, 1024, 1024, 64
        $region36: #{tpu_custom_call.1} parent=31 // pred_fallthru
          _
      $region32: #{tpu_custom_call.1} parent=5 // pred_fallthru
        _
      %p617 = scmp.le.s32.totalorder 2, %s12
      // Predicated region
      $region37: #{tpu_custom_call.1} parent=5 // pred_check
        %p618 = pneg %p617
      $region38: #{tpu_custom_call.1} parent=5 // pred_check_branch
        %620 = sbr.rel (%p618) target = $region40
      $region39: #{tpu_custom_call.1} parent=5 // pred_region
        %s621 = ssub.s32 %s12, 2
        // Predicated region
        $region41: #{tpu_custom_call.1} parent=39 // pred_check
          %p622 = pneg %p125
        $region42: #{tpu_custom_call.1} parent=39 // pred_check_branch
          %624 = sbr.rel (%p622) target = $region44
        $region43: #{tpu_custom_call.1} parent=39 // pred_region
          %s625 = sand.u32 %s110, 1
          %s626 = scalar_lea.sflag [#allocation3], %s625
          %s627 = sand.u32 %s110, 1
          %s628 = smul.addr %s627, 128
          %s629 = scalar_lea.vmem [#allocation2], %s628
          %631 = dma.done %s626, 2048
        $region44: #{tpu_custom_call.1} parent=39 // pred_fallthru
          _
      $region40: #{tpu_custom_call.1} parent=5 // pred_fallthru
        _
    $region6: #{tpu_custom_call.1} parent=1 // loop_footer
      %s16 = sadd.s32 1, %s12
    $region7: #{tpu_custom_call.1} parent=1 // loop_footer_branch
      %11 = sbr.rel target = $region3
    $region8: #{tpu_custom_call.1} parent=1 // loop_exit
      _
    %632 = vsyncpa [#allocation3], 1
    %s633 = scalar_lea.sflag [#allocation3], 1
    %634 = vsyncpa %s633, 1

</llo_original>
